<compile_context>
chip_gen: v7x
topology: tpu7x:2x2x1
jax: 0.10.0
libtpu: 0.0.40
codegen_flags: <defaults>
</compile_context>

<pallas_src>
import functools
import re

import jax
import jax.numpy as jnp
from jax.experimental import pallas as pl
from jax.experimental.pallas import tpu as pltpu


def _round_up(x, m):
    return ((x + m - 1) // m) * m


def _sublane_multiple(dtype):
    # Native sublane packing: 8 rows for 4-byte, 16 for 2-byte, 32 for 1-byte.
    return {4: 8, 2: 16, 1: 32}.get(jnp.dtype(dtype).itemsize, 8)


def _tpu_generation():
    try:
        kind = jax.devices()[0].device_kind.lower()
    except Exception:
        return None
    m = re.search(r"(\d+)", kind)
    return int(m.group(1)) if m else None


def _target_config():
    """Per-generation VMEM limit and megacore (2-TC) sharding default."""
    gen = _tpu_generation()
    if gen is not None and gen >= 7:
        # v7x: 2 TensorCores/chip, 64 MiB physical VMEM per TC.
        return {"num_shards": 2, "vmem_limit": 48 * 1024 * 1024}
    if gen in (5, 6):
        # v5e / v6e: 1 TC, 128 MiB physical VMEM.
        return {"num_shards": 1, "vmem_limit": 64 * 1024 * 1024}
    # Unknown / older chips: stay at the conservative scoped default.
    return {"num_shards": 1, "vmem_limit": 32 * 1024 * 1024}


def _choose_tiling(batch, num_classes, dtype, num_shards, budget_bytes,
                   tile_b=None, tile_c=None):
    """Pick (tile_b, tile_c, num_ctiles) with honest VMEM accounting."""
    itemsize = jnp.dtype(dtype).itemsize
    sub = _sublane_multiple(dtype)
    rows_per_shard = pl.cdiv(batch, num_shards)
    c_pad = _round_up(num_classes, 128)

    # ---- class (lane) tiling ----
    if tile_c is None:
        # Per-row VMEM cost for a full-width C block:
        #   2 logits buffers (lane-padded) + ~3x f32 intermediates
        #   + 2 x (TB,1) int32 target buffers (512 B each) + (TB,1) f32 acc.
        row_cost_full = 2 * c_pad * itemsize + 3 * c_pad * 4 + 2 * 512 + 512
        if budget_bytes // row_cost_full >= sub:
            tile_c = num_classes            # single full-width C tile
        else:
            # num_classes too large for even `sub` rows -> tile the class dim.
            tb_guess = max(sub, min(_round_up(rows_per_shard, sub), 256))
            per_row_fixed = 2 * 512 + 3 * 512
            per_class = 2 * itemsize + 3 * 4
            tile_c = max(budget_bytes // tb_guess - per_row_fixed, 0) // per_class

    if tile_c >= num_classes:
        tile_c, num_ctiles = num_classes, 1     # full-extent C block
    else:
        tile_c = max(128, (tile_c // 128) * 128)
        num_ctiles = pl.cdiv(num_classes, tile_c)

    # ---- batch (sublane) tiling ----
    c_blk = _round_up(tile_c, 128)
    row_cost = (2 * c_blk * itemsize + 3 * c_blk * 4 + 2 * 512
                + (3 if num_ctiles > 1 else 1) * 512)
    if tile_b is None:
        tile_b = max(sub, budget_bytes // row_cost)
    tile_b = min(tile_b, _round_up(rows_per_shard, sub))
    tile_b = max(sub, (tile_b // sub) * sub)
    if num_shards == 1 and tile_b >= batch:
        tile_b = batch                          # full-extent block: always legal
    return tile_b, tile_c, num_ctiles


def _cw_loss_kernel(logits_ref, targets_ref, loss_ref, acc_ref, *c_scratch,
                    margin, batch_size, num_classes, tile_b, tile_c,
                    btiles, num_ctiles, first_padded_tile, needs_row_mask):
    s = pl.program_id(0)            # batch shard (parallel; one per TensorCore)
    i = pl.program_id(1)            # batch tile within shard (arbitrary)
    k = pl.program_id(2)            # class tile (arbitrary / reduction)
    g = s * btiles + i              # global batch-tile index (unclamped)

    @pl.when(jnp.logical_and(i == 0, k == 0))
    def _init_shard():
        acc_ref[...] = jnp.zeros_like(acc_ref)

    logits = logits_ref[...].astype(jnp.float32)            # (TB, TC)
    tgt = targets_ref[...]                                   # (TB, 1) int32

    class_ids = jax.lax.broadcasted_iota(jnp.int32, (tile_b, tile_c), 1)
    if num_ctiles > 1:
        class_ids = class_ids + k * tile_c
    is_target = class_ids == tgt                              # (TB, TC) bool

    # Same formulation as the PyTorch reference:
    #   self  = sum(onehot * logits)
    #   other = max((1 - onehot) * logits - 1000 * onehot)
    self_part = jnp.sum(jnp.where(is_target, logits, 0.0), axis=1, keepdims=True)
    other_cand = jnp.where(is_target, -1000.0, logits)
    if num_ctiles * tile_c > num_classes:      # mask OOB class lanes (last C tile)
        other_cand = jnp.where(class_ids < num_classes, other_cand, -1000.0)
    other_part = jnp.max(other_cand, axis=1, keepdims=True)

    def _accumulate(per_sample):
        # Only tiles that can contain padded rows pay for the row mask.
        if needs_row_mask:
            @pl.when(g >= first_padded_tile)
            def _masked():
                row_ids = (jax.lax.broadcasted_iota(jnp.int32, (tile_b, 1), 0)
                           + g * tile_b)
                acc_ref[...] += jnp.where(row_ids < batch_size, per_sample, 0.0)

            @pl.when(g < first_padded_tile)
            def _unmasked():
                acc_ref[...] += per_sample
        else:
            acc_ref[...] += per_sample

    if num_ctiles == 1:
        _accumulate(jnp.maximum(self_part - other_part + margin, 0.0))
    else:
        self_ref, other_ref = c_scratch

        @pl.when(k == 0)
        def _init_ctiles():
            self_ref[...] = jnp.zeros_like(self_ref)
            other_ref[...] = jnp.full_like(other_ref, -1000.0)

        self_ref[...] = self_ref[...] + self_part
        other_ref[...] = jnp.maximum(other_ref[...], other_part)

        @pl.when(k == num_ctiles - 1)
        def _end_ctiles():
            _accumulate(jnp.maximum(self_ref[...] - other_ref[...] + margin, 0.0))

    @pl.when(jnp.logical_and(i == btiles - 1, k == num_ctiles - 1))
    def _finalize_shard():
        total = jnp.sum(acc_ref[...], keepdims=True)          # (1, 1)
        loss_ref[...] = jnp.broadcast_to(total, loss_ref.shape)


def cw_loss(logits, targets, *, num_classes, margin=50.0, reduce=True,
            tile_b=None, tile_c=None, num_shards=None, vmem_limit_bytes=None):
    """Pallas CW loss. logits: (B, num_classes) float, targets: (B,) int."""
    batch, c = logits.shape
    assert c == num_classes
    itemsize = jnp.dtype(logits.dtype).itemsize
    sub = _sublane_multiple(logits.dtype)

    cfg = _target_config()
    if num_shards is None:
        num_shards = cfg["num_shards"]
    if vmem_limit_bytes is None:
        vmem_limit_bytes = cfg["vmem_limit"]
    if batch < num_shards * sub:       # don't shard tiny batches
        num_shards = 1

    budget = int(vmem_limit_bytes * 0.7)          # headroom under the limit
    tile_b, tile_c, num_ctiles = _choose_tiling(
        batch, num_classes, logits.dtype, num_shards, budget,
        tile_b=tile_b, tile_c=tile_c)

    rows_per_shard = pl.cdiv(batch, num_shards)
    btiles = pl.cdiv(rows_per_shard, tile_b)
    coverage = num_shards * btiles * tile_b
    needs_row_mask = coverage > batch
    first_padded_tile = batch // tile_b
    # Clamp block index so no tile is *fully* out of bounds (its rows are then
    # duplicates of the last real tile and get zeroed by the row mask).
    last_btile = pl.cdiv(batch, tile_b) - 1

    def _logits_map(s, i, k):
        return (jnp.minimum(s * btiles + i, last_btile), k)

    def _targets_map(s, i, k):
        return (jnp.minimum(s * btiles + i, last_btile), 0)

    def _out_map(s, i, k):
        return (0, s)

    targets2d = targets.astype(jnp.int32).reshape(batch, 1)

    kernel = functools.partial(
        _cw_loss_kernel,
        margin=float(margin), batch_size=batch, num_classes=num_classes,
        tile_b=tile_b, tile_c=tile_c, btiles=btiles, num_ctiles=num_ctiles,
        first_padded_tile=first_padded_tile, needs_row_mask=needs_row_mask)

    scratch = [pltpu.VMEM((tile_b, 1), jnp.float32)]          # per-row acc
    if num_ctiles > 1:
        scratch += [pltpu.VMEM((tile_b, 1), jnp.float32),     # running self sum
                    pltpu.VMEM((tile_b, 1), jnp.float32)]     # running other max

    partials = pl.pallas_call(
        kernel,
        out_shape=jax.ShapeDtypeStruct((1, num_shards * 128), jnp.float32),
        grid=(num_shards, btiles, num_ctiles),
        in_specs=[
            pl.BlockSpec((tile_b, tile_c), _logits_map),
            pl.BlockSpec((tile_b, 1), _targets_map),
        ],
        out_specs=pl.BlockSpec((1, 128), _out_map),
        scratch_shapes=scratch,
        compiler_params=pltpu.CompilerParams(
            dimension_semantics=("parallel", "arbitrary", "arbitrary"),
            vmem_limit_bytes=vmem_limit_bytes),
        cost_estimate=pl.CostEstimate(
            flops=5 * batch * num_classes,
            transcendentals=0,
            bytes_accessed=batch * num_classes * itemsize + batch * 4
                           + num_shards * 512),
    )(logits, targets2d)      # native dtype streamed; f32 cast in-kernel

    loss = -jnp.sum(partials.reshape(num_shards, 128)[:, 0])
    if reduce:
        loss = loss / batch
    return loss


def cw_loss_ref(logits, targets, *, num_classes, margin=50.0, reduce=True):
    logits = logits.astype(jnp.float32)
    onehot = jax.nn.one_hot(targets, num_classes, dtype=jnp.float32)
    self_loss = jnp.sum(onehot * logits, axis=1)
    other_loss = jnp.max((1.0 - onehot) * logits - onehot * 1000.0, axis=1)
    loss = -jnp.sum(jnp.maximum(self_loss - other_loss + margin, 0.0))
    if reduce:
        loss = loss / logits.shape[0]
    return loss


if __name__ == "__main__":
    key = jax.random.PRNGKey(0)
    keys = jax.random.split(key, 8)

    def _check(out, ref):
        assert jnp.allclose(out, ref, rtol=1e-5, atol=1e-3), (out, ref)

    # 1) small single-tile f32 case
    C = 16
    logits = jax.random.normal(keys[0], (8, C), dtype=jnp.float32) * 5.0
    targets = jax.random.randint(keys[1], (8,), 0, C, dtype=jnp.int32)
    out = jax.block_until_ready(cw_loss(logits, targets, num_classes=C))
    _check(out, cw_loss_ref(logits, targets, num_classes=C))

    # 2) multi-tile case with a padded last tile (B % tile_b != 0)
    logits2 = jax.random.normal(keys[2], (20, C), dtype=jnp.float32) * 5.0
    targets2 = jax.random.randint(keys[3], (20,), 0, C, dtype=jnp.int32)
    out2 = jax.block_until_ready(
        cw_loss(logits2, targets2, num_classes=C, tile_b=8))
    _check(out2, cw_loss_ref(logits2, targets2, num_classes=C))

    # 3) native bf16 streaming (no host upcast; f32 math in-kernel)
    logits_bf16 = logits.astype(jnp.bfloat16)
    out3 = jax.block_until_ready(cw_loss(logits_bf16, targets, num_classes=C))
    _check(out3, cw_loss_ref(logits_bf16.astype(jnp.float32), targets,
                             num_classes=C))

    # 4) explicit 2-shard (megacore-style) split + reduce=False
    logits4 = jax.random.normal(keys[4], (64, C), dtype=jnp.float32) * 5.0
    targets4 = jax.random.randint(keys[5], (64,), 0, C, dtype=jnp.int32)
    out4 = jax.block_until_ready(
        cw_loss(logits4, targets4, num_classes=C, num_shards=2, reduce=False))
    _check(out4, cw_loss_ref(logits4, targets4, num_classes=C, reduce=False))

    # 5) class-tiled path (running sum/max across C tiles, padded class lanes)
    C5 = 300
    logits5 = jax.random.normal(keys[6], (16, C5), dtype=jnp.float32) * 5.0
    targets5 = jax.random.randint(keys[7], (16,), 0, C5, dtype=jnp.int32)
    out5 = jax.block_until_ready(
        cw_loss(logits5, targets5, num_classes=C5, tile_c=128))
    _check(out5, cw_loss_ref(logits5, targets5, num_classes=C5))

    print("KERNEL_OK")
</pallas_src>

<mosaic_0001>
module attributes {stable_mosaic.version = 11 : i64} {
  func.func @_cw_loss_kernel(%arg0: i32, %arg1: i32, %arg2: i32, %arg3: memref<8x16xf32, #tpu.memory_space<vmem>>, %arg4: memref<8x1xi32, #tpu.memory_space<vmem>>, %arg5: memref<1x128xf32, #tpu.memory_space<vmem>>, %arg6: memref<8x1xf32, #tpu.memory_space<vmem>>) attributes {dimension_semantics = [#tpu.dimension_semantics<parallel>, #tpu.dimension_semantics<arbitrary>, #tpu.dimension_semantics<arbitrary>], iteration_bounds = array<i64: 1, 1, 1>, scalar_prefetch = 0 : i64, scratch_operands = 1 : i64, tpu.core_type = #tpu.core_type<tc>, window_params = [{transform_indices = @transform_0, window_bounds = array<i64: 8, 16>}, {transform_indices = @transform_1, window_bounds = array<i64: 8, 1>}, {transform_indices = @transform_2, window_bounds = array<i64: 1, 128>}]} {
    %c0_i32 = arith.constant 0 : i32
    %0 = arith.cmpi eq, %arg1, %c0_i32 : i32
    %c0_i32_0 = arith.constant 0 : i32
    %1 = arith.cmpi eq, %arg2, %c0_i32_0 : i32
    %2 = arith.andi %0, %1 : i1
    %3 = arith.extui %2 : i1 to i32
    %c0_i32_1 = arith.constant 0 : i32
    %4 = arith.cmpi ne, %3, %c0_i32_1 : i32
    scf.if %4 {
      %cst_17 = arith.constant 0.000000e+00 : f32
      %31 = vector.broadcast %cst_17 : f32 to vector<8x1xf32>
      %c0_18 = arith.constant 0 : index
      %c0_19 = arith.constant 0 : index
      %32 = vector.load %arg6[%c0_18, %c0_19] : memref<8x1xf32, #tpu.memory_space<vmem>>, vector<8x1xf32>
      tpu.vector_store %arg6[%c0_18, %c0_19], %31 {strides = array<i32>} : memref<8x1xf32, #tpu.memory_space<vmem>>, vector<8x1xf32>,
    } else {
    }
    %c0 = arith.constant 0 : index
    %c0_2 = arith.constant 0 : index
    %5 = vector.load %arg3[%c0, %c0_2] : memref<8x16xf32, #tpu.memory_space<vmem>>, vector<8x16xf32>
    %c0_3 = arith.constant 0 : index
    %c0_4 = arith.constant 0 : index
    %6 = vector.load %arg4[%c0_3, %c0_4] : memref<8x1xi32, #tpu.memory_space<vmem>>, vector<8x1xi32>
    %7 = tpu.iota {dimensions = array<i32: 1>} : vector<8x16xi32>
    %8 = vector.broadcast %6 : vector<8x1xi32> to vector<8x16xi32>
    %9 = arith.cmpi eq, %7, %8 : vector<8x16xi32>
    %cst = arith.constant 0.000000e+00 : f32
    %10 = vector.broadcast %cst : f32 to vector<8x16xf32>
    %11 = arith.select %9, %5, %10 : vector<8x16xi1>, vector<8x16xf32>
    %cst_5 = arith.constant dense<0.000000e+00> : vector<8xf32>
    %12 = vector.multi_reduction <add>, %11, %cst_5 [1] : vector<8x16xf32> to vector<8xf32>
    %13 = vector.shape_cast %12 : vector<8xf32> to vector<8x1xf32>
    %cst_6 = arith.constant -1.000000e+03 : f32
    %14 = vector.broadcast %cst_6 : f32 to vector<8x16xf32>
    %15 = arith.select %9, %14, %5 : vector<8x16xi1>, vector<8x16xf32>
    %cst_7 = arith.constant dense<0xFF800000> : vector<8xf32>
    %16 = vector.multi_reduction <maximumf>, %15, %cst_7 [1] : vector<8x16xf32> to vector<8xf32>
    %17 = vector.shape_cast %16 : vector<8xf32> to vector<8x1xf32>
    %18 = arith.subf %13, %17 : vector<8x1xf32>
    %cst_8 = arith.constant 5.000000e+01 : f32
    %19 = vector.broadcast %cst_8 : f32 to vector<8x1xf32>
    %20 = arith.addf %18, %19 : vector<8x1xf32>
    %cst_9 = arith.constant 0.000000e+00 : f32
    %21 = vector.broadcast %cst_9 : f32 to vector<8x1xf32>
    %22 = arith.maximumf %20, %21 : vector<8x1xf32>
    %c0_10 = arith.constant 0 : index
    %c0_11 = arith.constant 0 : index
    %23 = vector.load %arg6[%c0_10, %c0_11] : memref<8x1xf32, #tpu.memory_space<vmem>>, vector<8x1xf32>
    %24 = arith.addf %23, %22 : vector<8x1xf32>
    %c0_12 = arith.constant 0 : index
    %c0_13 = arith.constant 0 : index
    %25 = vector.load %arg6[%c0_12, %c0_13] : memref<8x1xf32, #tpu.memory_space<vmem>>, vector<8x1xf32>
    tpu.vector_store %arg6[%c0_12, %c0_13], %24 {strides = array<i32>} : memref<8x1xf32, #tpu.memory_space<vmem>>, vector<8x1xf32>,
    %c0_i32_14 = arith.constant 0 : i32
    %26 = arith.cmpi eq, %arg1, %c0_i32_14 : i32
    %c0_i32_15 = arith.constant 0 : i32
    %27 = arith.cmpi eq, %arg2, %c0_i32_15 : i32
    %28 = arith.andi %26, %27 : i1
    %29 = arith.extui %28 : i1 to i32
    %c0_i32_16 = arith.constant 0 : i32
    %30 = arith.cmpi ne, %29, %c0_i32_16 : i32
    scf.if %30 {
      %c0_17 = arith.constant 0 : index
      %c0_18 = arith.constant 0 : index
      %31 = vector.load %arg6[%c0_17, %c0_18] : memref<8x1xf32, #tpu.memory_space<vmem>>, vector<8x1xf32>
      %32 = vector.shape_cast %31 : vector<8x1xf32> to vector<1x8x1xf32>
      %cst_19 = arith.constant dense<0.000000e+00> : vector<1xf32>
      %33 = vector.multi_reduction <add>, %32, %cst_19 [1, 2] : vector<1x8x1xf32> to vector<1xf32>
      %34 = vector.shape_cast %33 : vector<1xf32> to vector<1x1x1xf32>
      %35 = vector.extract %34[0, 0, 0] : f32 from vector<1x1x1xf32>
      %36 = vector.broadcast %35 : f32 to vector<1x1xf32>
      %37 = vector.shape_cast %36 : vector<1x1xf32> to vector<1x1xf32>
      %38 = vector.broadcast %37 : vector<1x1xf32> to vector<1x128xf32>
      %c0_20 = arith.constant 0 : index
      %c0_21 = arith.constant 0 : index
      %39 = vector.load %arg5[%c0_20, %c0_21] : memref<1x128xf32, #tpu.memory_space<vmem>>, vector<1x128xf32>
      tpu.vector_store %arg5[%c0_20, %c0_21], %38 {strides = array<i32>} : memref<1x128xf32, #tpu.memory_space<vmem>>, vector<1x128xf32>,
    } else {
    }
    return
  }
  func.func @transform_0(%arg0: i32, %arg1: i32, %arg2: i32) -> (i32, i32) {
    %c1_i32 = arith.constant 1 : i32
    %0 = arith.muli %arg0, %c1_i32 : i32
    %1 = arith.addi %0, %arg1 : i32
    %c0_i32 = arith.constant 0 : i32
    %2 = arith.minsi %1, %c0_i32 : i32
    %c0_i32_0 = arith.constant 0 : i32
    return %2, %arg2 : i32, i32
  }
  func.func @transform_1(%arg0: i32, %arg1: i32, %arg2: i32) -> (i32, i32) {
    %c1_i32 = arith.constant 1 : i32
    %0 = arith.muli %arg0, %c1_i32 : i32
    %1 = arith.addi %0, %arg1 : i32
    %c0_i32 = arith.constant 0 : i32
    %2 = arith.minsi %1, %c0_i32 : i32
    %c0_i32_0 = arith.constant 0 : i32
    %c0_i32_1 = arith.constant 0 : i32
    return %2, %c0_i32_0 : i32, i32
  }
  func.func @transform_2(%arg0: i32, %arg1: i32, %arg2: i32) -> (i32, i32) {
    %c0_i32 = arith.constant 0 : i32
    %c0_i32_0 = arith.constant 0 : i32
    return %c0_i32, %arg0 : i32, i32
  }
}

</mosaic_0001>

<llo_original>
// kernel: tpu_custom_call.1
$region0: #{tpu_custom_call.1}
  #allocation0 [shape = 'u32[]', space=smem, size = 0x4, offset = 0x4, fixed_abs, tag = 'smem constant byte address 0x4 - core index']
  #allocation1 [shape = 'u32[144,128]{1,0:T(1,128)}', space=vmem, size = 0x12000, scoped, tag = 'internal scratch']
  #allocation2 [shape = 'f32[8,1]{1,0:T(8,128)}', space=vmem, size = 0x1000, scoped, tag = 'scratch operand']
  %s0 = inlined_call_operand.vmem [shape: f32[8,16], index: 0, kind: input, shape index: {}]
  %s1 = inlined_call_operand.vmem [shape: s32[8,1], index: 1, kind: input, shape index: {}]
  %s2 = inlined_call_operand.hbm [shape: f32[1,128], index: 2, kind: output, shape index: {}]
  %s3 = sld [smem:[#allocation0]]
  $region26: #{tpu_custom_call.1} parent=0
    _
  %s5 = ssub.s32 1, %s3
  %s6 = scalar_select 0, %s5, %s3
  $region1: #{tpu_custom_call.1} parent=0
    #allocation3 [shape = 'u8[512]{0}', space=vmem, size = 0x400, scoped, tag = 'output window, operand 0, single buffered']
    #allocation4 [shape = 's32[1]{0}', space=sflag, size = 0x4, scoped, tag = 'scoped memory for tpu_custom_call.1']
    %7 = vsyncpa [#allocation4], 0
    // Predicated region
    $region2: #{tpu_custom_call.1} parent=1 // pred_check
      _
    $region3: #{tpu_custom_call.1} parent=1 // pred_check_branch
      %9 = sbr.rel (0) target = $region5
    $region4: #{tpu_custom_call.1} parent=1 // pred_region
      %s10 = sadd.s32 0, 0
      %p11 = scmp.lt.s32.totalorder %s10, 0
      %s12 = scalar_select %p11, %s10, 0
      %p13 = scmp.lt.s32.totalorder %s12, 0
      %s14 = scalar_select %p13, %s12, 0
      %s15 = smul.addr %s14, 8
      %s16 = scalar_lea.vmem %s0, %s15
      %s17 = sadd.s32 0, 0
      %p18 = scmp.lt.s32.totalorder %s17, 0
      %s19 = scalar_select %p18, %s17, 0
    $region5: #{tpu_custom_call.1} parent=1 // pred_fallthru
      _
    // Predicated region
    $region6: #{tpu_custom_call.1} parent=1 // pred_check
      _
    $region7: #{tpu_custom_call.1} parent=1 // pred_check_branch
      %21 = sbr.rel (0) target = $region9
    $region8: #{tpu_custom_call.1} parent=1 // pred_region
      %s22 = sadd.s32 0, 0
      %p23 = scmp.lt.s32.totalorder %s22, 0
      %s24 = scalar_select %p23, %s22, 0
      %p25 = scmp.lt.s32.totalorder %s24, 0
      %s26 = scalar_select %p25, %s24, 0
      %s27 = smul.addr %s26, 8
      %s28 = scalar_lea.vmem %s1, %s27
      %s29 = sadd.s32 0, 0
      %p30 = scmp.lt.s32.totalorder %s29, 0
      %s31 = scalar_select %p30, %s29, 0
    $region9: #{tpu_custom_call.1} parent=1 // pred_fallthru
      _
    %s32 = sadd.s32 0, 0
    %p33 = scmp.lt.s32.totalorder %s32, 0
    %s34 = scalar_select %p33, %s32, 0
    %p35 = scmp.lt.s32.totalorder %s34, 0
    %s36 = scalar_select %p35, %s34, 0
    %s37 = smul.addr %s36, 8
    %s38 = scalar_lea.vmem %s0, %s37
    %s39 = sadd.s32 0, 0
    %p40 = scmp.lt.s32.totalorder %s39, 0
    %s41 = scalar_select %p40, %s39, 0
    %p42 = scmp.lt.s32.totalorder %s41, 0
    %s43 = scalar_select %p42, %s41, 0
    %s44 = smul.addr %s43, 8
    %s45 = scalar_lea.vmem %s1, %s44
    %s46 = sadd.s32 0, 0
    %p47 = scmp.lt.s32.totalorder %s46, 0
    %s48 = scalar_select %p47, %s46, 0
    %p49 = scmp.lt.s32.totalorder %s48, 0
    %s50 = scalar_select %p49, %s48, 0
    %s51 = smul.addr %s50, 8
    %s52 = scalar_lea.vmem %s0, %s51
    %s53 = sadd.s32 0, 0
    %p54 = scmp.lt.s32.totalorder %s53, 0
    %s55 = scalar_select %p54, %s53, 0
    %s56 = sadd.s32 0, 0
    %p57 = scmp.lt.s32.totalorder %s56, 0
    %s58 = scalar_select %p57, %s56, 0
    %p59 = scmp.lt.s32.totalorder %s58, 0
    %s60 = scalar_select %p59, %s58, 0
    %s61 = smul.addr %s60, 8
    %s62 = scalar_lea.vmem %s1, %s61
    %s63 = sadd.s32 0, 0
    %p64 = scmp.lt.s32.totalorder %s63, 0
    %s65 = scalar_select %p64, %s63, 0
    %p66 = scmp.eq.s32.totalorder 0, 0
    %p67 = scmp.eq.s32.totalorder 0, 0
    %p68 = pnand %p66, %p67
    %p69 = pneg %p68
    // Predicated region
    $region10: #{tpu_custom_call.1} parent=1 // pred_check
      _
    $region11: #{tpu_custom_call.1} parent=1 // pred_check_branch
      %71 = sbr.rel (%p68) target = $region13
    $region12: #{tpu_custom_call.1} parent=1 // pred_region
      %vm72 = vcmask 7168
      %73 = vst.msk [vmem:[#allocation2] sm:$0xff] %vm72, 0.0
    $region13: #{tpu_custom_call.1} parent=1 // pred_fallthru
      _
    %v74 = vld [vmem:[%s52] sm:$0xff]
    %v75 = vld [vmem:[%s62] sm:$0xff]
    %v76 = vlaneseq
    %v77 = vand.u32 %v76, 127
    %78 = vset.pattern.permute.xlu0 0
    %79 = vperm.xlu0 %78, %v75
    %v80 = vpop.permute.xlu0 %79
    %vm81 = vcmp.eq.s32.totalorder %v77, %v80
    %v82 = vsel %vm81, %v74, 0.0
    %vm83 = vcmask 130048
    %v84 = vsel %vm83, %v82, 0.0
    %85 = vadd.xlane.f32.xlu0 %v84
    %v86 = vpop.xlane.xlu0 %85
    %v87 = vsel %vm81, -1000.0, %v74
    %v88 = vsel %vm83, %v87, -inf
    %89 = vmax.xlane.f32.xlu0 %v88
    %v90 = vpop.xlane.xlu0 %89
    %v91 = vsub.f32 %v86, %v90
    %v92 = vadd.f32 %v91, 50.0
    %v93 = vmax.f32 %v92, 0.0
    %v94 = vld [vmem:[#allocation2] sm:$0xff]
    %v95 = vadd.f32 %v94, %v93
    %vm96 = vcmask 7168
    %97 = vst.msk [vmem:[#allocation2] sm:$0xff] %vm96, %v95
    // Predicated region
    $region14: #{tpu_custom_call.1} parent=1 // pred_check
      _
    $region15: #{tpu_custom_call.1} parent=1 // pred_check_branch
      %99 = sbr.rel (%p68) target = $region17
    $region16: #{tpu_custom_call.1} parent=1 // pred_region
      %v100 = vld [vmem:[#allocation2] sm:$0xff]
      %v101 = vsel %vm96, %v100, 0.0
      %102 = vadd.xlane.f32.xlu0 %v101
      %v103 = vpop.xlane.xlu0 %102
      %v104 = vrot.slane %v103, 4
      %v105 = vadd.f32 %v103, %v104
      %v106 = vrot.slane %v105, 2
      %v107 = vadd.f32 %v105, %v106
      %v108 = vrot.slane %v107, 1
      %v109 = vadd.f32 %v107, %v108
      %s110 = vtos %v109
      %v111 = vstv %s110
      %112 = vst [vmem:[#allocation3] sm:$0x1] %v111
    $region17: #{tpu_custom_call.1} parent=1 // pred_fallthru
      _
    // Predicated region
    $region18: #{tpu_custom_call.1} parent=1 // pred_check
      _
    $region19: #{tpu_custom_call.1} parent=1 // pred_check_branch
      %114 = sbr.rel (0) target = $region21
    $region20: #{tpu_custom_call.1} parent=1 // pred_region
      %s116 = ssub.s32 16, 16
      %117 = vsyncadd [#allocation4], %s116
      %s119 = sshll.u32 [#allocation3], 4
      %s120 = int_to_ptr.vmem [resolvable:$true] %s119
      %122 = dma.vmem_to_hbm [thread:$0]  %s120, 16, %s2, [#allocation4]
    $region21: #{tpu_custom_call.1} parent=1 // pred_fallthru
      _
    // Predicated region
    $region22: #{tpu_custom_call.1} parent=1 // pred_check
      _
    $region23: #{tpu_custom_call.1} parent=1 // pred_check_branch
      %124 = sbr.rel (0) target = $region25
    $region24: #{tpu_custom_call.1} parent=1 // pred_region
      %125 = dma.done [#allocation4], 16
    $region25: #{tpu_custom_call.1} parent=1 // pred_fallthru
      _
    %126 = vsyncpa [#allocation4], 1

</llo_original>
